<compile_context>
chip_gen: v6e
topology: v6e:2x2x1
jax: 0.10.0
libtpu: 0.0.40
codegen_flags: <defaults>
</compile_context>

<pallas_src>
import jax
import jax.numpy as jnp
from jax.experimental import pallas as pl
from jax.experimental.pallas import tpu as pltpu


def _round_up(v, m):
    return -(-v // m) * m


def _make_masked_l1_kernel(tile_shape, tiled_axis, tile_extent, full_extent,
                           has_tail):
    """Kernel body with static tile geometry closed over.

    tile_shape  : kernel-visible block shape of x/t, (C, rt, 128) or (C, lane_tile).
    tiled_axis  : axis of `tile_shape` that the spatial grid axis tiles.
    tile_extent : block extent along the tiled axis.
    full_extent : full array extent along the tiled axis.
    """
    iota_shape = (1,) + tuple(tile_shape[1:])

    def kernel(x_ref, t_ref, m_ref, out_ref, acc_ref):
        s_i = pl.program_id(1)
        last_s = pl.num_programs(1) - 1

        # Fresh accumulator for every sample n (required for the megacore
        # split over the n axis: no state is carried across n).
        @pl.when(s_i == 0)
        def _():
            acc_ref[...] = jnp.zeros_like(acc_ref)

        x = x_ref[...].astype(jnp.float32)
        t = t_ref[...].astype(jnp.float32)
        m = m_ref[...].astype(jnp.float32)   # broadcasts over channels if cm == 1
        diff = jnp.abs((x - t) * m)          # identical to |x*m - t*m|

        if has_tail:
            # Only the last spatial block pays for the validity select.
            @pl.when(s_i != last_s)
            def _():
                acc_ref[...] += diff

            @pl.when(s_i == last_s)
            def _():
                idx = jax.lax.broadcasted_iota(jnp.int32, iota_shape, tiled_axis)
                valid = (s_i * tile_extent + idx) < full_extent
                # Select (not multiply): garbage / NaN in the over-read region
                # of the last block must not propagate.
                acc_ref[...] += jnp.where(valid, diff, 0.0)
        else:
            acc_ref[...] += diff

        # One cross-lane reduction + one full-vreg store per sample.
        @pl.when(s_i == last_s)
        def _():
            out_ref[...] = jnp.full(out_ref.shape, jnp.sum(acc_ref[...]),
                                    dtype=jnp.float32)

    return kernel


def masked_l1_loss(inputs, target, mask, normalize_over_valid=False,
                   target_block_bytes=2 << 20):
    """Equivalent of MaskedL1Loss.forward (nn.L1Loss mean reduction)."""
    assert inputs.shape == target.shape
    n, c, h, w = inputs.shape
    hw = h * w
    itemsize = inputs.dtype.itemsize

    # Keep the mask un-broadcast when it only broadcasts over the channel dim
    # (the typical FlowLoss case): it is then DMA'd once, not once per C.
    if (mask.ndim == inputs.ndim and mask.shape[0] == n
            and mask.shape[2:] == (h, w) and mask.shape[1] in (1, c)):
        cm = mask.shape[1]
        mask_nat = mask
    else:
        # TODO(synk): general broadcast patterns fall back to materializing.
        cm = c
        mask_nat = jnp.broadcast_to(mask, inputs.shape)
    if mask_nat.dtype == jnp.bool_:
        mask_nat = mask_nat.astype(jnp.float32)
    m_itemsize = mask_nat.dtype.itemsize

    dense = (hw % 128) == 0
    if dense:
        # Sublane/lane-dense layout: spatial -> (rows, 128), a free reshape.
        rows = hw // 128
        x_a = inputs.reshape(n, c, rows, 128)
        t_a = target.reshape(n, c, rows, 128)
        m_a = mask_nat.reshape(n, cm, rows, 128)

        rt_cap = max(8, (target_block_bytes // (c * 128 * itemsize)) // 8 * 8)
        rt = rows if rows <= rt_cap else rt_cap
        grid_s = pl.cdiv(rows, rt)
        has_tail = (rows % rt) != 0
        tile_extent, full_extent = rt, rows

        x_block = (None, c, rt, 128)
        m_block = (None, cm, rt, 128)
        idx_map = lambda i, s: (i, 0, s, 0)
        x_tile = (c, rt, 128)

        in_blk = c * _round_up(rt, max(8, 32 // itemsize)) * 128 * itemsize
        m_blk = cm * _round_up(rt, max(8, 32 // m_itemsize)) * 128 * m_itemsize
        acc_blk = c * _round_up(rt, 8) * 128 * 4
    else:
        # Ragged fallback: (C, lane_tile) tiles + lane tail masking.
        x_a = inputs.reshape(n, c, hw)
        t_a = target.reshape(n, c, hw)
        m_a = mask_nat.reshape(n, cm, hw)

        lt_cap = max(128, (target_block_bytes // (c * itemsize)) // 128 * 128)
        lane_tile = hw if hw <= lt_cap else lt_cap
        grid_s = pl.cdiv(hw, lane_tile)
        has_tail = (hw % lane_tile) != 0
        tile_extent, full_extent = lane_tile, hw

        x_block = (None, c, lane_tile)
        m_block = (None, cm, lane_tile)
        idx_map = lambda i, s: (i, 0, s)
        x_tile = (c, lane_tile)

        lanes = _round_up(lane_tile, 128)
        in_blk = _round_up(c, max(8, 32 // itemsize)) * lanes * itemsize
        m_blk = _round_up(cm, max(8, 32 // m_itemsize)) * lanes * m_itemsize
        acc_blk = _round_up(c, 8) * lanes * 4

    # Honest VMEM budget: 2 streamed inputs x 2 pipeline buffers + mask
    # buffers + the f32 accumulator + per-sample output tiles + slack.
    total_vmem = 2 * 2 * in_blk + 2 * m_blk + acc_blk + 2 * 8 * 128 * 4 + (1 << 20)
    vmem_limit = int(min(max(int(total_vmem * 1.3), 16 << 20), 48 << 20))

    kernel = _make_masked_l1_kernel(x_tile, 1, tile_extent, full_extent, has_tail)

    cost = pl.CostEstimate(
        flops=int(5 * n * c * hw),
        transcendentals=0,
        bytes_accessed=int(2 * inputs.size * itemsize
                           + m_a.size * m_itemsize + n * 8 * 128 * 4),
    )

    partials = pl.pallas_call(
        kernel,
        out_shape=jax.ShapeDtypeStruct((n, 8, 128), jnp.float32),
        grid_spec=pltpu.PrefetchScalarGridSpec(
            num_scalar_prefetch=0,
            grid=(n, grid_s),
            in_specs=[
                pl.BlockSpec(x_block, idx_map),
                pl.BlockSpec(x_block, idx_map),
                pl.BlockSpec(m_block, idx_map),
            ],
            out_specs=pl.BlockSpec((None, 8, 128), lambda i, s: (i, 0, 0)),
            scratch_shapes=[pltpu.VMEM(x_tile, jnp.float32)],
        ),
        compiler_params=pltpu.CompilerParams(
            dimension_semantics=("parallel", "arbitrary"),
            vmem_limit_bytes=vmem_limit,
        ),
        cost_estimate=cost,
    )(x_a, t_a, m_a)

    abs_sum = jnp.sum(partials[:, 0, 0])
    numel = jnp.float32(inputs.size)              # numel of the expanded mask
    loss = abs_sum / numel                        # nn.L1Loss mean reduction
    if normalize_over_valid:
        # Sum over the channel-expanded mask, via a plain XLA reduce (cheaper
        # than carrying a second full-tile accumulator in the kernel).
        expand = jnp.float32(inputs.size // mask_nat.size)
        mask_sum = jnp.sum(mask_nat.astype(jnp.float32)) * expand
        loss = loss * numel / (mask_sum + 1e-6)
    return loss


def _reference(inputs, target, mask, normalize_over_valid=False):
    mask_e = jnp.broadcast_to(mask, inputs.shape)
    loss = jnp.mean(jnp.abs(inputs * mask_e - target * mask_e))
    if normalize_over_valid:
        loss = loss * mask_e.size / (jnp.sum(mask_e) + 1e-6)
    return loss


if __name__ == "__main__":
    key = jax.random.PRNGKey(0)
    k1, k2, k3 = jax.random.split(key, 3)

    # Case 1: typical FlowLoss usage — mask broadcast over channels,
    # HW % 128 == 0 -> dense path, single spatial block.
    N, C, H, W = 2, 4, 16, 16
    x = jax.random.normal(k1, (N, C, H, W), dtype=jnp.float32)
    t = jax.random.normal(k2, (N, C, H, W), dtype=jnp.float32)
    m = (jax.random.uniform(k3, (N, 1, H, W)) > 0.3).astype(jnp.float32)

    out1 = jax.block_until_ready(masked_l1_loss(x, t, m, False))
    out1n = jax.block_until_ready(masked_l1_loss(x, t, m, True))
    ref1 = _reference(x, t, m, False)
    ref1n = _reference(x, t, m, True)
    assert jnp.allclose(out1, ref1, rtol=1e-5, atol=1e-5), (out1, ref1)
    assert jnp.allclose(out1n, ref1n, rtol=1e-5, atol=1e-5), (out1n, ref1n)

    # Case 2: dense path with a tiled row grid and a ragged row tail
    # (rows = 18, rt = 8 -> 3 spatial blocks, last one masked).
    H2, W2 = 48, 48
    x2 = jax.random.normal(k1, (N, C, H2, W2), dtype=jnp.float32)
    t2 = jax.random.normal(k2, (N, C, H2, W2), dtype=jnp.float32)
    m2 = (jax.random.uniform(k3, (N, 1, H2, W2)) > 0.5).astype(jnp.float32)
    out2 = jax.block_until_ready(
        masked_l1_loss(x2, t2, m2, True, target_block_bytes=4096))
    ref2 = _reference(x2, t2, m2, True)
    assert jnp.allclose(out2, ref2, rtol=1e-5, atol=1e-5), (out2, ref2)

    # Case 3: ragged spatial extent (HW % 128 != 0), full-channel mask,
    # multi-block lane grid with lane-tail masking.
    H3, W3 = 15, 13
    x3 = jax.random.normal(k1, (N, C, H3, W3), dtype=jnp.float32)
    t3 = jax.random.normal(k2, (N, C, H3, W3), dtype=jnp.float32)
    m3 = (jax.random.uniform(k3, (N, C, H3, W3)) > 0.5).astype(jnp.float32)
    out3 = jax.block_until_ready(
        masked_l1_loss(x3, t3, m3, True, target_block_bytes=2048))
    ref3 = _reference(x3, t3, m3, True)
    assert jnp.allclose(out3, ref3, rtol=1e-5, atol=1e-5), (out3, ref3)

    print("KERNEL_OK")
</pallas_src>

<mosaic_0001>
module attributes {stable_mosaic.version = 11 : i64} {
  func.func @kernel(%arg0: i32, %arg1: i32, %arg2: memref<1x4x2x128xf32, #tpu.memory_space<vmem>>, %arg3: memref<1x4x2x128xf32, #tpu.memory_space<vmem>>, %arg4: memref<1x1x2x128xf32, #tpu.memory_space<vmem>>, %arg5: memref<1x8x128xf32, #tpu.memory_space<vmem>>, %arg6: memref<4x2x128xf32, #tpu.memory_space<vmem>>) attributes {dimension_semantics = [#tpu.dimension_semantics<parallel>, #tpu.dimension_semantics<arbitrary>], iteration_bounds = array<i64: 2, 1>, scalar_prefetch = 0 : i64, scratch_operands = 1 : i64, tpu.core_type = #tpu.core_type<tc>, window_params = [{transform_indices = @transform_0, window_bounds = array<i64: 1, 4, 2, 128>}, {transform_indices = @transform_1, window_bounds = array<i64: 1, 4, 2, 128>}, {transform_indices = @transform_2, window_bounds = array<i64: 1, 1, 2, 128>}, {transform_indices = @transform_3, window_bounds = array<i64: 1, 8, 128>}]} {
    %c0_i32 = arith.constant 0 : i32
    %0 = arith.cmpi eq, %arg1, %c0_i32 : i32
    %1 = arith.extui %0 : i1 to i32
    %c0_i32_0 = arith.constant 0 : i32
    %2 = arith.cmpi ne, %1, %c0_i32_0 : i32
    scf.if %2 {
      %cst = arith.constant 0.000000e+00 : f32
      %19 = vector.broadcast %cst : f32 to vector<4x2x128xf32>
      %c0_20 = arith.constant 0 : index
      %c0_21 = arith.constant 0 : index
      %c0_22 = arith.constant 0 : index
      %20 = vector.load %arg6[%c0_20, %c0_21, %c0_22] : memref<4x2x128xf32, #tpu.memory_space<vmem>>, vector<4x2x128xf32>
      tpu.vector_store %arg6[%c0_20, %c0_21, %c0_22], %19 {strides = array<i32>} : memref<4x2x128xf32, #tpu.memory_space<vmem>>, vector<4x2x128xf32>,
    } else {
    }
    %c0 = arith.constant 0 : index
    %c0_1 = arith.constant 0 : index
    %c0_2 = arith.constant 0 : index
    %c0_3 = arith.constant 0 : index
    %3 = vector.load %arg2[%c0, %c0_1, %c0_2, %c0_3] : memref<1x4x2x128xf32, #tpu.memory_space<vmem>>, vector<1x4x2x128xf32>
    %4 = vector.shape_cast %3 : vector<1x4x2x128xf32> to vector<4x2x128xf32>
    %c0_4 = arith.constant 0 : index
    %c0_5 = arith.constant 0 : index
    %c0_6 = arith.constant 0 : index
    %c0_7 = arith.constant 0 : index
    %5 = vector.load %arg3[%c0_4, %c0_5, %c0_6, %c0_7] : memref<1x4x2x128xf32, #tpu.memory_space<vmem>>, vector<1x4x2x128xf32>
    %6 = vector.shape_cast %5 : vector<1x4x2x128xf32> to vector<4x2x128xf32>
    %c0_8 = arith.constant 0 : index
    %c0_9 = arith.constant 0 : index
    %c0_10 = arith.constant 0 : index
    %c0_11 = arith.constant 0 : index
    %7 = vector.load %arg4[%c0_8, %c0_9, %c0_10, %c0_11] : memref<1x1x2x128xf32, #tpu.memory_space<vmem>>, vector<1x1x2x128xf32>
    %8 = vector.shape_cast %7 : vector<1x1x2x128xf32> to vector<1x2x128xf32>
    %9 = arith.subf %4, %6 : vector<4x2x128xf32>
    %10 = vector.broadcast %8 : vector<1x2x128xf32> to vector<4x2x128xf32>
    %11 = arith.mulf %9, %10 : vector<4x2x128xf32>
    %12 = math.absf %11 : vector<4x2x128xf32>
    %c0_12 = arith.constant 0 : index
    %c0_13 = arith.constant 0 : index
    %c0_14 = arith.constant 0 : index
    %13 = vector.load %arg6[%c0_12, %c0_13, %c0_14] : memref<4x2x128xf32, #tpu.memory_space<vmem>>, vector<4x2x128xf32>
    %14 = arith.addf %13, %12 : vector<4x2x128xf32>
    %c0_15 = arith.constant 0 : index
    %c0_16 = arith.constant 0 : index
    %c0_17 = arith.constant 0 : index
    %15 = vector.load %arg6[%c0_15, %c0_16, %c0_17] : memref<4x2x128xf32, #tpu.memory_space<vmem>>, vector<4x2x128xf32>
    tpu.vector_store %arg6[%c0_15, %c0_16, %c0_17], %14 {strides = array<i32>} : memref<4x2x128xf32, #tpu.memory_space<vmem>>, vector<4x2x128xf32>,
    %c0_i32_18 = arith.constant 0 : i32
    %16 = arith.cmpi eq, %arg1, %c0_i32_18 : i32
    %17 = arith.extui %16 : i1 to i32
    %c0_i32_19 = arith.constant 0 : i32
    %18 = arith.cmpi ne, %17, %c0_i32_19 : i32
    scf.if %18 {
      %c0_20 = arith.constant 0 : index
      %c0_21 = arith.constant 0 : index
      %c0_22 = arith.constant 0 : index
      %19 = vector.load %arg6[%c0_20, %c0_21, %c0_22] : memref<4x2x128xf32, #tpu.memory_space<vmem>>, vector<4x2x128xf32>
      %20 = vector.shape_cast %19 : vector<4x2x128xf32> to vector<1x4x2x128xf32>
      %cst = arith.constant dense<0.000000e+00> : vector<1xf32>
      %21 = vector.multi_reduction <add>, %20, %cst [1, 2, 3] : vector<1x4x2x128xf32> to vector<1xf32>
      %22 = vector.shape_cast %21 : vector<1xf32> to vector<1x1x1x1xf32>
      %23 = vector.extract %22[0, 0, 0, 0] : f32 from vector<1x1x1x1xf32>
      %24 = vector.broadcast %23 : f32 to vector<8x128xf32>
      %c0_23 = arith.constant 0 : index
      %c0_24 = arith.constant 0 : index
      %c0_25 = arith.constant 0 : index
      %25 = vector.load %arg5[%c0_23, %c0_24, %c0_25] : memref<1x8x128xf32, #tpu.memory_space<vmem>>, vector<1x8x128xf32>
      %26 = vector.shape_cast %25 : vector<1x8x128xf32> to vector<8x128xf32>
      %27 = vector.shape_cast %24 : vector<8x128xf32> to vector<1x8x128xf32>
      tpu.vector_store %arg5[%c0_23, %c0_24, %c0_25], %27 {strides = array<i32>} : memref<1x8x128xf32, #tpu.memory_space<vmem>>, vector<1x8x128xf32>,
    } else {
    }
    return
  }
  func.func @transform_0(%arg0: i32, %arg1: i32) -> (i32, i32, i32, i32) {
    %c0_i32 = arith.constant 0 : i32
    %c0_i32_0 = arith.constant 0 : i32
    %c0_i32_1 = arith.constant 0 : i32
    return %arg0, %c0_i32, %arg1, %c0_i32_0 : i32, i32, i32, i32
  }
  func.func @transform_1(%arg0: i32, %arg1: i32) -> (i32, i32, i32, i32) {
    %c0_i32 = arith.constant 0 : i32
    %c0_i32_0 = arith.constant 0 : i32
    %c0_i32_1 = arith.constant 0 : i32
    return %arg0, %c0_i32, %arg1, %c0_i32_0 : i32, i32, i32, i32
  }
  func.func @transform_2(%arg0: i32, %arg1: i32) -> (i32, i32, i32, i32) {
    %c0_i32 = arith.constant 0 : i32
    %c0_i32_0 = arith.constant 0 : i32
    %c0_i32_1 = arith.constant 0 : i32
    return %arg0, %c0_i32, %arg1, %c0_i32_0 : i32, i32, i32, i32
  }
  func.func @transform_3(%arg0: i32, %arg1: i32) -> (i32, i32, i32) {
    %c0_i32 = arith.constant 0 : i32
    %c0_i32_0 = arith.constant 0 : i32
    %c0_i32_1 = arith.constant 0 : i32
    return %arg0, %c0_i32, %c0_i32_0 : i32, i32, i32
  }
}

</mosaic_0001>

<llo_original>
// kernel: tpu_custom_call.1
$region0: #{tpu_custom_call.1}
  #allocation0 [shape = 'u32[]', space=smem, size = 0x4, offset = 0x4, fixed_abs, tag = 'smem constant byte address 0x4 - core index']
  #allocation1 [shape = 'u32[144,128]{1,0:T(1,128)}', space=vmem, size = 0x12000, scoped, tag = 'internal scratch']
  #allocation2 [shape = 'f32[4,2,128]{2,1,0:T(2,128)}', space=vmem, size = 0x1000, scoped, tag = 'scratch operand']
  %s0 = inlined_call_operand.hbm [shape: f32[2,4,2,128], index: 0, kind: input, shape index: {}]
  %s1 = inlined_call_operand.hbm [shape: f32[2,4,2,128], index: 1, kind: input, shape index: {}]
  %s2 = inlined_call_operand.hbm [shape: f32[2,1,2,128], index: 2, kind: input, shape index: {}]
  %s3 = inlined_call_operand.hbm [shape: f32[2,8,128], index: 3, kind: output, shape index: {}]
  %s4 = sld [smem:[#allocation0]]
  $region65: #{tpu_custom_call.1} parent=0
    _
  %s6 = ssub.s32 1, %s4
  %s7 = scalar_select 0, %s6, %s4
  $region1: #{tpu_custom_call.1} parent=0
    #allocation3 [shape = 'u8[8192]{0}', space=vmem, size = 0x2000, scoped, tag = 'input window, operand 0']
    #allocation4 [shape = 's32[2]{0}', space=sflag, size = 0x8, scoped, tag = 'scoped memory for tpu_custom_call.1']
    #allocation5 [shape = 's32[2]{0}', space=sflag, size = 0x8, scoped, tag = 'scoped memory for tpu_custom_call.1']
    #allocation6 [shape = 'u8[8192]{0}', space=vmem, size = 0x2000, scoped, tag = 'input window, operand 1']
    #allocation7 [shape = 's32[2]{0}', space=sflag, size = 0x8, scoped, tag = 'scoped memory for tpu_custom_call.1']
    #allocation8 [shape = 'u8[2048]{0}', space=vmem, size = 0x800, scoped, tag = 'input window, operand 2']
    #allocation9 [shape = 'u8[8192]{0}', space=vmem, size = 0x2000, scoped, tag = 'output window, operand 0']
    %8 = vsyncpa [#allocation4], 0
    %s9 = scalar_lea.sflag [#allocation4], 1
    %10 = vsyncpa %s9, 0
    %11 = vsyncpa [#allocation7], 0
    %s12 = scalar_lea.sflag [#allocation7], 1
    %13 = vsyncpa %s12, 0
    %14 = vsyncpa [#allocation5], 0
    %s15 = scalar_lea.sflag [#allocation5], 1
    %16 = vsyncpa %s15, 0
    loop: start=0, step=1, limit=4
    $region2: #{tpu_custom_call.1} parent=1 // loop_pre_header
      _
    $region3: #{tpu_custom_call.1} parent=1 // loop_header
      %s18 = sphi 0, %s22
      %p19 = scmp.ge.s32.totalorder %s18, 4
      %s25 = sphi 0, %s37
      %s26 = sphi 0, %s33
      %s27 = sphi 0, %s25
      %s28 = sphi 0, %s26
      %s29 = sphi 0, %s27
      %s30 = sphi 0, %s28
      %s42 = sphi 0, %s44
      %s45 = sphi 0, %s42
      %s46 = sphi 0, %s45
      %s62 = sphi 0, %s46
      %s70 = sphi 0, %s72
      %s73 = sphi 0, %s70
      %s74 = sphi 0, %s73
      %s90 = sphi 0, %s74
      %s98 = sphi 0, %s100
      %s101 = sphi 0, %s98
      %s102 = sphi 0, %s101
      %s118 = sphi 0, %s102
      %s124 = sphi 0, %s126
      %s127 = sphi 0, %s124
      %s128 = sphi 0, %s127
      %s144 = sphi 0, %s128
    $region4: #{tpu_custom_call.1} parent=1 // loop_header_branch
      %21 = sbr.rel (%p19) target = $region8
    $region5: #{tpu_custom_call.1} parent=1 // loop_body
      %s23 = ssub.s32 %s18, 1
      %s24 = ssub.s32 %s18, 2
      %s31 = sadd.s32 1, %s26
      %p32 = scmp.ge.s32.totalorder %s31, 1
      %s33 = scalar_select %p32, 0, %s31
      %s34 = sadd.s32 1, %s25
      %s35 = scalar_select %p32, %s34, %s25
      %p36 = scmp.ge.s32.totalorder %s35, 2
      %s37 = scalar_select %p36, 0, %s35
      %s38 = ssub.s32 %s25, %s37
      %s39 = ssub.s32 %s26, %s33
      %s40 = sor.u32 %s38, %s39
      %p41 = scmp.eq.s32.totalorder %s40, 0
      %s43 = sadd.s32 %s42, 1
      %s44 = scalar_select %p41, %s42, %s43
      %p47 = pneg %p41
      %p48 = scmp.eq.s32.totalorder %s18, 1
      %p49 = por %p47, %p48
      %p50 = scmp.ne.s32.totalorder %s42, %s45
      %p51 = scmp.eq.s32.totalorder %s18, 0
      %p52 = por %p50, %p51
      %p53 = scmp.ne.s32.totalorder %s42, %s45
      %p54 = scmp.eq.s32.totalorder %s23, 1
      %p55 = por %p53, %p54
      %p56 = scmp.ne.s32.totalorder %s45, %s46
      %p57 = scmp.eq.s32.totalorder %s23, 0
      %p58 = por %p56, %p57
      %p59 = scmp.ne.s32.totalorder %s45, %s46
      %p60 = scmp.eq.s32.totalorder %s24, 1
      %p61 = por %p59, %p60
      %p63 = scmp.ne.s32.totalorder %s46, %s62
      %p64 = scmp.eq.s32.totalorder %s24, 0
      %p65 = por %p63, %p64
      %s66 = ssub.s32 %s25, %s37
      %s67 = ssub.s32 %s26, %s33
      %s68 = sor.u32 %s66, %s67
      %p69 = scmp.eq.s32.totalorder %s68, 0
      %s71 = sadd.s32 %s70, 1
      %s72 = scalar_select %p69, %s70, %s71
      %p75 = pneg %p69
      %p76 = scmp.eq.s32.totalorder %s18, 1
      %p77 = por %p75, %p76
      %p78 = scmp.ne.s32.totalorder %s70, %s73
      %p79 = scmp.eq.s32.totalorder %s18, 0
      %p80 = por %p78, %p79
      %p81 = scmp.ne.s32.totalorder %s70, %s73
      %p82 = scmp.eq.s32.totalorder %s23, 1
      %p83 = por %p81, %p82
      %p84 = scmp.ne.s32.totalorder %s73, %s74
      %p85 = scmp.eq.s32.totalorder %s23, 0
      %p86 = por %p84, %p85
      %p87 = scmp.ne.s32.totalorder %s73, %s74
      %p88 = scmp.eq.s32.totalorder %s24, 1
      %p89 = por %p87, %p88
      %p91 = scmp.ne.s32.totalorder %s74, %s90
      %p92 = scmp.eq.s32.totalorder %s24, 0
      %p93 = por %p91, %p92
      %s94 = ssub.s32 %s25, %s37
      %s95 = ssub.s32 %s26, %s33
      %s96 = sor.u32 %s94, %s95
      %p97 = scmp.eq.s32.totalorder %s96, 0
      %s99 = sadd.s32 %s98, 1
      %s100 = scalar_select %p97, %s98, %s99
      %p103 = pneg %p97
      %p104 = scmp.eq.s32.totalorder %s18, 1
      %p105 = por %p103, %p104
      %p106 = scmp.ne.s32.totalorder %s98, %s101
      %p107 = scmp.eq.s32.totalorder %s18, 0
      %p108 = por %p106, %p107
      %p109 = scmp.ne.s32.totalorder %s98, %s101
      %p110 = scmp.eq.s32.totalorder %s23, 1
      %p111 = por %p109, %p110
      %p112 = scmp.ne.s32.totalorder %s101, %s102
      %p113 = scmp.eq.s32.totalorder %s23, 0
      %p114 = por %p112, %p113
      %p115 = scmp.ne.s32.totalorder %s101, %s102
      %p116 = scmp.eq.s32.totalorder %s24, 1
      %p117 = por %p115, %p116
      %p119 = scmp.ne.s32.totalorder %s102, %s118
      %p120 = scmp.eq.s32.totalorder %s24, 0
      %p121 = por %p119, %p120
      %s122 = ssub.s32 %s25, %s37
      %p123 = scmp.eq.s32.totalorder %s122, 0
      %s125 = sadd.s32 %s124, 1
      %s126 = scalar_select %p123, %s124, %s125
      %p129 = pneg %p123
      %p130 = scmp.eq.s32.totalorder %s18, 1
      %p131 = por %p129, %p130
      %p132 = scmp.ne.s32.totalorder %s124, %s127
      %p133 = scmp.eq.s32.totalorder %s18, 0
      %p134 = por %p132, %p133
      %p135 = scmp.ne.s32.totalorder %s124, %s127
      %p136 = scmp.eq.s32.totalorder %s23, 1
      %p137 = por %p135, %p136
      %p138 = scmp.ne.s32.totalorder %s127, %s128
      %p139 = scmp.eq.s32.totalorder %s23, 0
      %p140 = por %p138, %p139
      %p141 = scmp.ne.s32.totalorder %s127, %s128
      %p142 = scmp.eq.s32.totalorder %s24, 1
      %p143 = por %p141, %p142
      %p145 = scmp.ne.s32.totalorder %s128, %s144
      %p146 = scmp.eq.s32.totalorder %s24, 0
      %p147 = por %p145, %p146
      %p148 = scmp.le.s32.totalorder 1, %s18
      %p149 = scmp.lt.s32.totalorder %s18, 3
      %p150 = pnand %p148, %p149
      %p151 = pneg %p150
      // Predicated region
      $region9: #{tpu_custom_call.1} parent=5 // pred_check
        _
      $region10: #{tpu_custom_call.1} parent=5 // pred_check_branch
        %153 = sbr.rel (%p150) target = $region12
      $region11: #{tpu_custom_call.1} parent=5 // pred_region
        %s154 = ssub.s32 %s18, 1
      $region12: #{tpu_custom_call.1} parent=5 // pred_fallthru
        _
      %p155 = scmp.lt.s32.totalorder %s18, 2
      // Predicated region
      $region13: #{tpu_custom_call.1} parent=5 // pred_check
        %p156 = pneg %p155
      $region14: #{tpu_custom_call.1} parent=5 // pred_check_branch
        %158 = sbr.rel (%p156) target = $region16
      $region15: #{tpu_custom_call.1} parent=5 // pred_region
        // Predicated region
        $region17: #{tpu_custom_call.1} parent=15 // pred_check
          %p159 = pneg %p52
        $region18: #{tpu_custom_call.1} parent=15 // pred_check_branch
          %161 = sbr.rel (%p159) target = $region20
        $region19: #{tpu_custom_call.1} parent=15 // pred_region
          %s162 = sand.u32 %s42, 1
          %s163 = scalar_lea.sflag [#allocation4], %s162
          %s164 = sand.u32 %s42, 1
          %s165 = smul.addr %s164, 8
          %s166 = scalar_lea.vmem [#allocation3], %s165
          %s168 = ssub.s32 128, 128
          %169 = vsyncadd %s163, %s168
          %s170 = smul.addr %s25, 4
          %s171 = sadd.s32 %s26, %s170
          %s172 = smul.addr %s171, 32
          %s173 = scalar_lea.hbm %s0, %s172
          %s174 = sshll.u32 %s166, 4
          %s175 = int_to_ptr.vmem [resolvable:$true] %s174
          %180 = dma.hbm_to_vmem [thread:$0]  %s173, 128, %s175, %s163, 32, 32, 2
        $region20: #{tpu_custom_call.1} parent=15 // pred_fallthru
          _
        // Predicated region
        $region21: #{tpu_custom_call.1} parent=15 // pred_check
          %p181 = pneg %p80
        $region22: #{tpu_custom_call.1} parent=15 // pred_check_branch
          %183 = sbr.rel (%p181) target = $region24
        $region23: #{tpu_custom_call.1} parent=15 // pred_region
          %s184 = sand.u32 %s18, 1
          %s185 = scalar_lea.sflag [#allocation7], %s184
          %s186 = sand.u32 %s70, 1
          %s187 = smul.addr %s186, 8
          %s188 = scalar_lea.vmem [#allocation6], %s187
          %s190 = ssub.s32 128, 128
          %191 = vsyncadd %s185, %s190
          %s192 = smul.addr %s25, 4
          %s193 = sadd.s32 %s26, %s192
          %s194 = smul.addr %s193, 32
          %s195 = scalar_lea.hbm %s1, %s194
          %s196 = sshll.u32 %s188, 4
          %s197 = int_to_ptr.vmem [resolvable:$true] %s196
          %202 = dma.hbm_to_vmem [thread:$0]  %s195, 128, %s197, %s185, 32, 32, 2
        $region24: #{tpu_custom_call.1} parent=15 // pred_fallthru
          _
        // Predicated region
        $region25: #{tpu_custom_call.1} parent=15 // pred_check
          %p203 = pneg %p108
        $region26: #{tpu_custom_call.1} parent=15 // pred_check_branch
          %205 = sbr.rel (%p203) target = $region28
        $region27: #{tpu_custom_call.1} parent=15 // pred_region
          %s206 = sand.u32 %s18, 1
          %s207 = scalar_lea.sflag [#allocation7], %s206
          %s208 = sand.u32 %s98, 1
          %s209 = smul.addr %s208, 2
          %s210 = scalar_lea.vmem [#allocation8], %s209
          %s212 = ssub.s32 32, 32
          %213 = vsyncadd %s207, %s212
          %s214 = sadd.s32 %s26, %s25
          %s215 = smul.addr %s214, 32
          %s216 = scalar_lea.hbm %s2, %s215
          %s218 = sshll.u32 %s210, 4
          %s219 = int_to_ptr.vmem [resolvable:$true] %s218
          %221 = dma.hbm_to_vmem [thread:$0]  %s216, 32, %s219, %s207
        $region28: #{tpu_custom_call.1} parent=15 // pred_fallthru
          _
      $region16: #{tpu_custom_call.1} parent=5 // pred_fallthru
        _
      %p222 = scmp.le.s32.totalorder 1, %s18
      %p223 = scmp.lt.s32.totalorder %s18, 3
      %p224 = pnand %p222, %p223
      %p225 = pneg %p224
      // Predicated region
      $region29: #{tpu_custom_call.1} parent=5 // pred_check
        _
      $region30: #{tpu_custom_call.1} parent=5 // pred_check_branch
        %227 = sbr.rel (%p224) target = $region32
      $region31: #{tpu_custom_call.1} parent=5 // pred_region
        %s228 = ssub.s32 %s18, 1
        %s229 = sand.u32 %s45, 1
        %s230 = scalar_lea.sflag [#allocation4], %s229
        %s231 = sand.u32 %s45, 1
        %s232 = smul.addr %s231, 8
        %s233 = scalar_lea.vmem [#allocation3], %s232
        // Predicated region
        $region33: #{tpu_custom_call.1} parent=31 // pred_check
          %p234 = pneg %p58
        $region34: #{tpu_custom_call.1} parent=31 // pred_check_branch
          %236 = sbr.rel (%p234) target = $region36
        $region35: #{tpu_custom_call.1} parent=31 // pred_region
          %237 = dma.done %s230, 128
        $region36: #{tpu_custom_call.1} parent=31 // pred_fallthru
          _
        %s238 = sand.u32 %s23, 1
        %s239 = scalar_lea.sflag [#allocation7], %s238
        %s240 = sand.u32 %s73, 1
        %s241 = smul.addr %s240, 8
        %s242 = scalar_lea.vmem [#allocation6], %s241
        // Predicated region
        $region37: #{tpu_custom_call.1} parent=31 // pred_check
          %p243 = pneg %p86
        $region38: #{tpu_custom_call.1} parent=31 // pred_check_branch
          %245 = sbr.rel (%p243) target = $region40
        $region39: #{tpu_custom_call.1} parent=31 // pred_region
          %246 = dma.done %s239, 128
        $region40: #{tpu_custom_call.1} parent=31 // pred_fallthru
          _
        %s247 = sand.u32 %s23, 1
        %s248 = scalar_lea.sflag [#allocation7], %s247
        %s249 = sand.u32 %s101, 1
        %s250 = smul.addr %s249, 2
        %s251 = scalar_lea.vmem [#allocation8], %s250
        // Predicated region
        $region41: #{tpu_custom_call.1} parent=31 // pred_check
          %p252 = pneg %p114
        $region42: #{tpu_custom_call.1} parent=31 // pred_check_branch
          %254 = sbr.rel (%p252) target = $region44
        $region43: #{tpu_custom_call.1} parent=31 // pred_region
          %255 = dma.done %s248, 32
        $region44: #{tpu_custom_call.1} parent=31 // pred_fallthru
          _
        %s256 = sand.u32 %s45, 1
        %s257 = scalar_lea.sflag [#allocation4], %s256
        %s258 = sand.u32 %s45, 1
        %s259 = smul.addr %s258, 8
        %s260 = scalar_lea.vmem [#allocation3], %s259
        %p261 = pneg %p58
        %p262 = pneg %p55
        %s263 = sand.u32 %s23, 1
        %s264 = scalar_lea.sflag [#allocation7], %s263
        %s265 = sand.u32 %s73, 1
        %s266 = smul.addr %s265, 8
        %s267 = scalar_lea.vmem [#allocation6], %s266
        %p268 = pneg %p86
        %p269 = pneg %p83
        %s270 = sand.u32 %s23, 1
        %s271 = scalar_lea.sflag [#allocation7], %s270
        %s272 = sand.u32 %s101, 1
        %s273 = smul.addr %s272, 2
        %s274 = scalar_lea.vmem [#allocation8], %s273
        %p275 = pneg %p114
        %p276 = pneg %p111
        %p277 = pneg %p140
        %p278 = pneg %p137
        %s279 = sand.u32 %s127, 1
        %s280 = scalar_lea.sflag [#allocation5], %s279
        %s281 = sand.u32 %s127, 1
        %s282 = smul.addr %s281, 8
        %s283 = scalar_lea.vmem [#allocation9], %s282
        %p284 = scmp.eq.s32.totalorder %s28, 0
        // Predicated region
        $region45: #{tpu_custom_call.1} parent=31 // pred_check
          %p285 = pneg %p284
        $region46: #{tpu_custom_call.1} parent=31 // pred_check_branch
          %287 = sbr.rel (%p285) target = $region48
        $region47: #{tpu_custom_call.1} parent=31 // pred_region
          %288 = vst [vmem:[#allocation2] sm:$0x3] 0.0
          %289 = vst [vmem:[#allocation2 + $0x2] sm:$0x3] 0.0
          %290 = vst [vmem:[#allocation2 + $0x4] sm:$0x3] 0.0
          %291 = vst [vmem:[#allocation2 + $0x6] sm:$0x3] 0.0
        $region48: #{tpu_custom_call.1} parent=31 // pred_fallthru
          _
        %v292 = vld [vmem:[%s233] sm:$0x3]
        %v293 = vld [vmem:[%s233 + $0x2] sm:$0x3]
        %v294 = vld [vmem:[%s233 + $0x4] sm:$0x3]
        %v295 = vld [vmem:[%s233 + $0x6] sm:$0x3]
        %v296 = vld [vmem:[%s242] sm:$0x3]
        %v297 = vld [vmem:[%s242 + $0x2] sm:$0x3]
        %v298 = vld [vmem:[%s242 + $0x4] sm:$0x3]
        %v299 = vld [vmem:[%s242 + $0x6] sm:$0x3]
        %v300 = vld [vmem:[%s251] sm:$0x3]
        %v301 = vsub.f32 %v292, %v296
        %v302 = vsub.f32 %v293, %v297
        %v303 = vsub.f32 %v294, %v298
        %v304 = vsub.f32 %v295, %v299
        %v305 = vmul.f32 %v301, %v300
        %v306 = vmul.f32 %v302, %v300
        %v307 = vmul.f32 %v303, %v300
        %v308 = vmul.f32 %v304, %v300
        %v309 = vand.u32 2147483647, %v305
        %v310 = vand.u32 2147483647, %v306
        %v311 = vand.u32 2147483647, %v307
        %v312 = vand.u32 2147483647, %v308
        %v313 = vld [vmem:[#allocation2] sm:$0x3]
        %v314 = vld [vmem:[#allocation2 + $0x2] sm:$0x3]
        %v315 = vld [vmem:[#allocation2 + $0x4] sm:$0x3]
        %v316 = vld [vmem:[#allocation2 + $0x6] sm:$0x3]
        %v317 = vadd.f32 %v313, %v309
        %v318 = vadd.f32 %v314, %v310
        %v319 = vadd.f32 %v315, %v311
        %v320 = vadd.f32 %v316, %v312
        %321 = vst [vmem:[#allocation2] sm:$0x3] %v317
        %322 = vst [vmem:[#allocation2 + $0x2] sm:$0x3] %v318
        %323 = vst [vmem:[#allocation2 + $0x4] sm:$0x3] %v319
        %324 = vst [vmem:[#allocation2 + $0x6] sm:$0x3] %v320
        // Predicated region
        $region49: #{tpu_custom_call.1} parent=31 // pred_check
          %p325 = pneg %p284
        $region50: #{tpu_custom_call.1} parent=31 // pred_check_branch
          %327 = sbr.rel (%p325) target = $region52
        $region51: #{tpu_custom_call.1} parent=31 // pred_region
          %v328 = vld [vmem:[#allocation2] sm:$0x3]
          %v329 = vld [vmem:[#allocation2 + $0x2] sm:$0x3]
          %v330 = vld [vmem:[#allocation2 + $0x4] sm:$0x3]
          %v331 = vld [vmem:[#allocation2 + $0x6] sm:$0x3]
          %vm332 = vcmask 1041408
          %v333 = vsel %vm332, %v328, 0.0
          %v334 = vsel %vm332, %v329, 0.0
          %v335 = vadd.f32 %v333, %v334
          %v336 = vsel %vm332, %v330, 0.0
          %v337 = vadd.f32 %v335, %v336
          %v338 = vsel %vm332, %v331, 0.0
          %v339 = vadd.f32 %v337, %v338
          %340 = vadd.xlane.f32.xlu0 %v339
          %v341 = vpop.xlane.xlu0 %340
          %v342 = vrot.slane %v341, 4
          %v343 = vadd.f32 %v341, %v342
          %v344 = vrot.slane %v343, 2
          %v345 = vadd.f32 %v343, %v344
          %v346 = vrot.slane %v345, 1
          %v347 = vadd.f32 %v345, %v346
          %s348 = vtos %v347
          %v349 = vstv %s348
          %350 = vst [vmem:[%s283] sm:$0xff] %v349
        $region52: #{tpu_custom_call.1} parent=31 // pred_fallthru
          _
        %s351 = sand.u32 %s127, 1
        %s352 = scalar_lea.sflag [#allocation5], %s351
        %s353 = sand.u32 %s127, 1
        %s354 = smul.addr %s353, 8
        %s355 = scalar_lea.vmem [#allocation9], %s354
        // Predicated region
        $region53: #{tpu_custom_call.1} parent=31 // pred_check
          %p356 = pneg %p137
        $region54: #{tpu_custom_call.1} parent=31 // pred_check_branch
          %358 = sbr.rel (%p356) target = $region56
        $region55: #{tpu_custom_call.1} parent=31 // pred_region
          %s360 = ssub.s32 128, 128
          %361 = vsyncadd %s352, %s360
          %s362 = smul.addr %s27, 128
          %s363 = scalar_lea.hbm %s3, %s362
          %s365 = sshll.u32 %s355, 4
          %s366 = int_to_ptr.vmem [resolvable:$true] %s365
          %368 = dma.vmem_to_hbm [thread:$0]  %s366, 128, %s363, %s352
        $region56: #{tpu_custom_call.1} parent=31 // pred_fallthru
          _
      $region32: #{tpu_custom_call.1} parent=5 // pred_fallthru
        _
      %p369 = scmp.le.s32.totalorder 2, %s18
      // Predicated region
      $region57: #{tpu_custom_call.1} parent=5 // pred_check
        %p370 = pneg %p369
      $region58: #{tpu_custom_call.1} parent=5 // pred_check_branch
        %372 = sbr.rel (%p370) target = $region60
      $region59: #{tpu_custom_call.1} parent=5 // pred_region
        %s373 = ssub.s32 %s18, 2
        // Predicated region
        $region61: #{tpu_custom_call.1} parent=59 // pred_check
          %p374 = pneg %p143
        $region62: #{tpu_custom_call.1} parent=59 // pred_check_branch
          %376 = sbr.rel (%p374) target = $region64
        $region63: #{tpu_custom_call.1} parent=59 // pred_region
          %s377 = sand.u32 %s128, 1
          %s378 = scalar_lea.sflag [#allocation5], %s377
          %s379 = sand.u32 %s128, 1
          %s380 = smul.addr %s379, 8
          %s381 = scalar_lea.vmem [#allocation9], %s380
          %382 = dma.done %s378, 128
        $region64: #{tpu_custom_call.1} parent=59 // pred_fallthru
          _
      $region60: #{tpu_custom_call.1} parent=5 // pred_fallthru
        _
    $region6: #{tpu_custom_call.1} parent=1 // loop_footer
      %s22 = sadd.s32 1, %s18
    $region7: #{tpu_custom_call.1} parent=1 // loop_footer_branch
      %17 = sbr.rel target = $region3
    $region8: #{tpu_custom_call.1} parent=1 // loop_exit
      _
    %383 = vsyncpa [#allocation4], 1
    %s384 = scalar_lea.sflag [#allocation4], 1
    %385 = vsyncpa %s384, 1
    %386 = vsyncpa [#allocation7], 1
    %s387 = scalar_lea.sflag [#allocation7], 1
    %388 = vsyncpa %s387, 1
    %389 = vsyncpa [#allocation5], 1
    %s390 = scalar_lea.sflag [#allocation5], 1
    %391 = vsyncpa %s390, 1

</llo_original>
